<compile_context>
chip_gen: v5e
topology: v5e:2x2
jax: 0.10.0
libtpu: 0.0.40
codegen_flags: <defaults>
</compile_context>

<pallas_src>
import functools

import jax
import jax.numpy as jnp
from jax.experimental import pallas as pl
from jax.experimental.pallas import tpu as pltpu


def _round_up(a, b):
    return (a + b - 1) // b * b


# ----------------------------------------------------------------------------
# Fully fused forward (small graphs): 3 layers + mean-pool + fc1 + fc2
# ----------------------------------------------------------------------------
def _gnnml1_fused_kernel(x_ref, adj_ref, pool_ref, *rest, hidden, n_layers):
    out_ref = rest[-1]
    layer_refs = rest[:4 * n_layers]
    w1_ref, b1_ref, w2_ref, b2_ref = rest[4 * n_layers:4 * n_layers + 4]

    adj = adj_ref[...].astype(jnp.bfloat16)            # cast once, reuse 3x
    h = x_ref[...]                                      # [N, F] f32
    for l in range(n_layers):                           # unrolled at trace time
        w_lin, b_lin, w_conv, b_conv = layer_refs[4 * l:4 * l + 4]
        hb = h.astype(jnp.bfloat16)
        # neighbor aggregation:  agg[i] = sum_j adj[i, j] * h[j]
        agg = jnp.dot(adj, hb, preferred_element_type=jnp.float32)
        # fused fcL1 | fcL2 | fcL3 -> one wide [F, 3H] matmul
        lin = jnp.dot(hb, w_lin[...].astype(jnp.bfloat16),
                      preferred_element_type=jnp.float32) + b_lin[...]
        conv = jnp.dot(agg.astype(jnp.bfloat16),
                       w_conv[...].astype(jnp.bfloat16),
                       preferred_element_type=jnp.float32) + b_conv[...]
        a = lin[:, 0 * hidden:1 * hidden]
        m1 = lin[:, 1 * hidden:2 * hidden]
        m2 = lin[:, 2 * hidden:3 * hidden]
        h = jnp.maximum(a + conv + m1 * m2, 0.0)        # ReLU, f32

    pooled = jnp.dot(pool_ref[...], h, preferred_element_type=jnp.float32)
    z = jnp.dot(pooled, w1_ref[...], preferred_element_type=jnp.float32) + b1_ref[...]
    y = jnp.dot(z, w2_ref[...], preferred_element_type=jnp.float32) + b2_ref[...]
    out_ref[...] = y.astype(out_ref.dtype)


def gnnml1_fused(x_pad, adj, pool_mat, layers, fc1_w, fc1_b, fc2_w, fc2_b,
                 *, hidden):
    n_layers = len(layers)
    flat = []
    for lp in layers:
        flat += [lp["w_lin"], lp["b_lin"], lp["w_conv"], lp["b_conv"]]
    args = [x_pad, adj, pool_mat] + flat + [fc1_w, fc1_b, fc2_w, fc2_b]

    n_pad, f = x_pad.shape
    g = pool_mat.shape[0]
    c = fc2_w.shape[1]

    flops = 0
    width = f
    for _ in range(n_layers):
        flops += 2 * n_pad * n_pad * width
        flops += 2 * n_pad * width * 4 * hidden
        width = hidden
    flops += 2 * g * (n_pad * hidden + hidden * 10 + 10 * c)
    bytes_accessed = (n_pad * n_pad                      # int8 adjacency
                      + n_pad * f * 4 + g * n_pad * 4    # x + pool matrix
                      + sum(4 * a.size for a in flat)
                      + 4 * (fc1_w.size + fc1_b.size + fc2_w.size + fc2_b.size)
                      + g * c * 4)

    kernel = functools.partial(_gnnml1_fused_kernel,
                               hidden=hidden, n_layers=n_layers)
    return pl.pallas_call(
        kernel,
        out_shape=jax.ShapeDtypeStruct((g, c), jnp.float32),
        grid=(1,),
        in_specs=[pl.BlockSpec(a.shape, lambda i: (0, 0)) for a in args],
        out_specs=pl.BlockSpec((g, c), lambda i: (0, 0)),
        compiler_params=pltpu.CompilerParams(
            dimension_semantics=("arbitrary",),
            vmem_limit_bytes=48 * 1024 * 1024),
        cost_estimate=pl.CostEstimate(flops=flops, transcendentals=0,
                                      bytes_accessed=bytes_accessed),
    )(*args)


# ----------------------------------------------------------------------------
# Large-graph path, kernel 1: one fused GNNML1 layer, tiled over dst nodes
# ----------------------------------------------------------------------------
def _gnnml1_layer_kernel(x_src_ref, x_dst_ref, adj_ref, w_lin_ref, b_lin_ref,
                         w_conv_ref, b_conv_ref, out_ref, *, hidden):
    # agg[i] = sum_j adj[i, j] * x[j]   (SpectConv message passing, aggr=add)
    adj = adj_ref[...].astype(jnp.bfloat16)            # int8 counts -> bf16
    x_src = x_src_ref[...].astype(jnp.bfloat16)        # [N, F]
    agg = jnp.dot(adj, x_src, preferred_element_type=jnp.float32)   # [TM, F]

    # Fused fcL1 | fcL2 | fcL3: one wide [F, 3H] matmul.
    x_dst = x_dst_ref[...].astype(jnp.bfloat16)        # [TM, F]
    w_lin = w_lin_ref[...].astype(jnp.bfloat16)        # [F, 3H]
    lin = jnp.dot(x_dst, w_lin,
                  preferred_element_type=jnp.float32) + b_lin_ref[...]   # [TM, 3H]

    conv = jnp.dot(agg.astype(jnp.bfloat16),
                   w_conv_ref[...].astype(jnp.bfloat16),
                   preferred_element_type=jnp.float32) + b_conv_ref[...]  # [TM, H]

    a = lin[:, 0 * hidden:1 * hidden]
    m1 = lin[:, 1 * hidden:2 * hidden]
    m2 = lin[:, 2 * hidden:3 * hidden]

    out = jnp.maximum(a + conv + m1 * m2, 0.0)         # ReLU
    out_ref[...] = out.astype(out_ref.dtype)           # single full-width store


def gnnml1_layer(x, adj, w_lin, b_lin, w_conv, b_conv, *, hidden, tile_dst):
    n_pad, f = x.shape
    assert n_pad % tile_dst == 0 and adj.shape == (n_pad, n_pad)
    grid = (n_pad // tile_dst,)

    flops = 2 * n_pad * (n_pad * f + f * 4 * hidden)
    bytes_accessed = (n_pad * n_pad
                      + 2 * n_pad * f * 4
                      + 4 * (w_lin.size + b_lin.size + w_conv.size + b_conv.size)
                      + n_pad * hidden * 4)

    kernel = functools.partial(_gnnml1_layer_kernel, hidden=hidden)
    return pl.pallas_call(
        kernel,
        out_shape=jax.ShapeDtypeStruct((n_pad, hidden), jnp.float32),
        grid=grid,
        in_specs=[
            pl.BlockSpec((n_pad, f), lambda i: (0, 0)),         # x as source
            pl.BlockSpec((tile_dst, f), lambda i: (i, 0)),      # x dst tile
            pl.BlockSpec((tile_dst, n_pad), lambda i: (i, 0)),  # adj dst tile
            pl.BlockSpec(w_lin.shape, lambda i: (0, 0)),
            pl.BlockSpec(b_lin.shape, lambda i: (0, 0)),
            pl.BlockSpec(w_conv.shape, lambda i: (0, 0)),
            pl.BlockSpec(b_conv.shape, lambda i: (0, 0)),
        ],
        out_specs=pl.BlockSpec((tile_dst, hidden), lambda i: (i, 0)),
        compiler_params=pltpu.CompilerParams(
            dimension_semantics=("parallel",),       # dst tiles -> both TCs
            vmem_limit_bytes=32 * 1024 * 1024),
        cost_estimate=pl.CostEstimate(flops=flops, transcendentals=0,
                                      bytes_accessed=bytes_accessed),
    )(x, x, adj, w_lin, b_lin, w_conv, b_conv)


# ----------------------------------------------------------------------------
# Large-graph path, kernel 2: global_mean_pool + fc1 + fc2
# ----------------------------------------------------------------------------
def _pool_mlp_kernel(h_ref, pool_ref, w1_ref, b1_ref, w2_ref, b2_ref, out_ref):
    pooled = jnp.dot(pool_ref[...], h_ref[...],
                     preferred_element_type=jnp.float32)           # [G, H]
    z = jnp.dot(pooled, w1_ref[...],
                preferred_element_type=jnp.float32) + b1_ref[...]   # [G, 10]
    y = jnp.dot(z, w2_ref[...],
                preferred_element_type=jnp.float32) + b2_ref[...]   # [G, C]
    out_ref[...] = y.astype(out_ref.dtype)


def pool_mlp(h, pool_mat, w1, b1, w2, b2):
    g = pool_mat.shape[0]
    c = w2.shape[1]
    return pl.pallas_call(
        _pool_mlp_kernel,
        out_shape=jax.ShapeDtypeStruct((g, c), jnp.float32),
        grid=(1,),
        in_specs=[
            pl.BlockSpec(h.shape, lambda i: (0, 0)),
            pl.BlockSpec(pool_mat.shape, lambda i: (0, 0)),
            pl.BlockSpec(w1.shape, lambda i: (0, 0)),
            pl.BlockSpec(b1.shape, lambda i: (0, 0)),
            pl.BlockSpec(w2.shape, lambda i: (0, 0)),
            pl.BlockSpec(b2.shape, lambda i: (0, 0)),
        ],
        out_specs=pl.BlockSpec((g, c), lambda i: (0, 0)),
        compiler_params=pltpu.CompilerParams(
            dimension_semantics=("arbitrary",)),
    )(h, pool_mat, w1, b1, w2, b2)


# ----------------------------------------------------------------------------
# Full GNNML1 forward (glue in plain JAX: adjacency build, padding, pool mat)
# ----------------------------------------------------------------------------
def gnnml1_forward(params, x, edge_index, batch, *, num_graphs,
                   tile_dst=None, force_path=None):
    if x.ndim == 1:                     # mirrors `if len(x.shape)==1: x=x[:,None]`
        x = x[:, None]
    n, f = x.shape
    hidden = params["layers"][0]["w_conv"].shape[1]

    if tile_dst is None:
        tile_dst = min(128, _round_up(n, 8))
    tile_dst = max(8, _round_up(tile_dst, 8))
    n_pad = _round_up(n, tile_dst)

    # Dense adjacency A[dst, src] = #edges src->dst (edge_attr == 1), stored as
    # int8.  Padded rows/cols are zero so they never contribute to real nodes.
    src, dst = edge_index[0], edge_index[1]
    adj = (jnp.zeros((n_pad, n_pad), jnp.int32)
           .at[dst, src].add(1)
           .astype(jnp.int8))

    h0 = jnp.zeros((n_pad, f), jnp.float32).at[:n].set(x.astype(jnp.float32))

    # global_mean_pool: row-normalized one-hot assignment [G, n_pad]; padded
    # node columns are zero so padded nodes never enter the pooled mean.
    onehot = (batch[None, :] == jnp.arange(num_graphs)[:, None]).astype(jnp.float32)
    counts = jnp.maximum(jnp.sum(onehot, axis=1, keepdims=True), 1.0)
    pool_mat = (jnp.zeros((num_graphs, n_pad), jnp.float32)
                .at[:, :n].set(onehot / counts))

    # Path selection: fully fused single call if everything fits in VMEM.
    fused_bytes = (3 * n_pad * n_pad                        # adj int8 + bf16 copy
                   + 4 * n_pad * (f + 10 * hidden)          # x + intermediates
                   + 4 * num_graphs * n_pad                 # pool matrix
                   + sum(4 * p.size for lp in params["layers"] for p in lp.values())
                   + 4 * (params["fc1_w"].size + params["fc2_w"].size + 64))
    use_fused = (force_path == "fused") or (
        force_path is None and fused_bytes < 16 * 1024 * 1024)

    if use_fused:
        return gnnml1_fused(h0, adj, pool_mat, params["layers"],
                            params["fc1_w"], params["fc1_b"],
                            params["fc2_w"], params["fc2_b"], hidden=hidden)

    h = h0
    for lp in params["layers"]:
        h = gnnml1_layer(h, adj, lp["w_lin"], lp["b_lin"],
                         lp["w_conv"], lp["b_conv"],
                         hidden=hidden, tile_dst=tile_dst)
    return pool_mlp(h, pool_mat, params["fc1_w"], params["fc1_b"],
                    params["fc2_w"], params["fc2_b"])


def init_params(key, in_features, hidden, num_classes):
    f_ins = [in_features, hidden, hidden]   # layer input widths (concat=False)
    ks = jax.random.split(key, 3 * 4 + 4)
    s = 0.2
    idx = 0
    layers = []
    for f_in in f_ins:
        w_lin = s * jax.random.normal(ks[idx], (f_in, 3 * hidden), jnp.float32); idx += 1
        b_lin = s * jax.random.normal(ks[idx], (1, 3 * hidden), jnp.float32); idx += 1
        w_conv = s * jax.random.normal(ks[idx], (f_in, hidden), jnp.float32); idx += 1
        b_conv = s * jax.random.normal(ks[idx], (1, hidden), jnp.float32); idx += 1
        layers.append(dict(w_lin=w_lin, b_lin=b_lin, w_conv=w_conv, b_conv=b_conv))
    fc1_w = s * jax.random.normal(ks[idx], (hidden, 10), jnp.float32); idx += 1
    fc1_b = s * jax.random.normal(ks[idx], (1, 10), jnp.float32); idx += 1
    fc2_w = s * jax.random.normal(ks[idx], (10, num_classes), jnp.float32); idx += 1
    fc2_b = s * jax.random.normal(ks[idx], (1, num_classes), jnp.float32); idx += 1
    return {"layers": layers, "fc1_w": fc1_w, "fc1_b": fc1_b,
            "fc2_w": fc2_w, "fc2_b": fc2_b}


if __name__ == "__main__":
    in_features, hidden, num_classes = 4, 32, 3
    num_graphs, nodes_per_graph = 4, 16
    n_nodes = num_graphs * nodes_per_graph            # 64 nodes total

    key = jax.random.PRNGKey(0)
    k_x, k_p = jax.random.split(key)

    x = jax.random.normal(k_x, (n_nodes, in_features), jnp.float32)
    batch = jnp.repeat(jnp.arange(num_graphs, dtype=jnp.int32), nodes_per_graph)

    # ring edges (both directions) inside each graph, PyG-style edge_index [2, E]
    src_list, dst_list = [], []
    for g in range(num_graphs):
        base = g * nodes_per_graph
        for k in range(nodes_per_graph):
            a, b = base + k, base + (k + 1) % nodes_per_graph
            src_list += [a, b]
            dst_list += [b, a]
    edge_index = jnp.array([src_list, dst_list], jnp.int32)

    params = init_params(k_p, in_features, hidden, num_classes)

    # Fast fully-fused path (single pallas_call).
    out_fused = jax.block_until_ready(
        gnnml1_forward(params, x, edge_index, batch,
                       num_graphs=num_graphs, force_path="fused"))
    # Large-graph tiled path (per-layer kernels), cross-checked against fused.
    out_tiled = jax.block_until_ready(
        gnnml1_forward(params, x, edge_index, batch,
                       num_graphs=num_graphs, tile_dst=16, force_path="tiled"))

    assert out_fused.shape == (num_graphs, num_classes)
    assert out_tiled.shape == (num_graphs, num_classes)
    assert bool(jnp.all(jnp.isfinite(out_fused)))
    assert bool(jnp.all(jnp.isfinite(out_tiled)))
    assert bool(jnp.allclose(out_fused, out_tiled, rtol=2e-2, atol=2e-2))
    print("KERNEL_OK")
</pallas_src>

<mosaic_0001>
module attributes {stable_mosaic.version = 11 : i64} {
  func.func @_gnnml1_fused_kernel(%arg0: i32, %arg1: memref<64x4xf32, #tpu.memory_space<vmem>>, %arg2: memref<64x64xi8, #tpu.memory_space<vmem>>, %arg3: memref<4x64xf32, #tpu.memory_space<vmem>>, %arg4: memref<4x96xf32, #tpu.memory_space<vmem>>, %arg5: memref<1x96xf32, #tpu.memory_space<vmem>>, %arg6: memref<4x32xf32, #tpu.memory_space<vmem>>, %arg7: memref<1x32xf32, #tpu.memory_space<vmem>>, %arg8: memref<32x96xf32, #tpu.memory_space<vmem>>, %arg9: memref<1x96xf32, #tpu.memory_space<vmem>>, %arg10: memref<32x32xf32, #tpu.memory_space<vmem>>, %arg11: memref<1x32xf32, #tpu.memory_space<vmem>>, %arg12: memref<32x96xf32, #tpu.memory_space<vmem>>, %arg13: memref<1x96xf32, #tpu.memory_space<vmem>>, %arg14: memref<32x32xf32, #tpu.memory_space<vmem>>, %arg15: memref<1x32xf32, #tpu.memory_space<vmem>>, %arg16: memref<32x10xf32, #tpu.memory_space<vmem>>, %arg17: memref<1x10xf32, #tpu.memory_space<vmem>>, %arg18: memref<10x3xf32, #tpu.memory_space<vmem>>, %arg19: memref<1x3xf32, #tpu.memory_space<vmem>>, %arg20: memref<4x3xf32, #tpu.memory_space<vmem>>) attributes {dimension_semantics = [#tpu.dimension_semantics<arbitrary>], iteration_bounds = array<i64: 1>, scalar_prefetch = 0 : i64, scratch_operands = 0 : i64, tpu.core_type = #tpu.core_type<tc>, window_params = [{pipeline_mode = #tpu.pipeline_mode<synchronous>, transform_indices = @transform_0, window_bounds = array<i64: 64, 4>}, {pipeline_mode = #tpu.pipeline_mode<synchronous>, transform_indices = @transform_1, window_bounds = array<i64: 64, 64>}, {pipeline_mode = #tpu.pipeline_mode<synchronous>, transform_indices = @transform_2, window_bounds = array<i64: 4, 64>}, {pipeline_mode = #tpu.pipeline_mode<synchronous>, transform_indices = @transform_3, window_bounds = array<i64: 4, 96>}, {pipeline_mode = #tpu.pipeline_mode<synchronous>, transform_indices = @transform_4, window_bounds = array<i64: 1, 96>}, {pipeline_mode = #tpu.pipeline_mode<synchronous>, transform_indices = @transform_5, window_bounds = array<i64: 4, 32>}, {pipeline_mode = #tpu.pipeline_mode<synchronous>, transform_indices = @transform_6, window_bounds = array<i64: 1, 32>}, {pipeline_mode = #tpu.pipeline_mode<synchronous>, transform_indices = @transform_7, window_bounds = array<i64: 32, 96>}, {pipeline_mode = #tpu.pipeline_mode<synchronous>, transform_indices = @transform_8, window_bounds = array<i64: 1, 96>}, {pipeline_mode = #tpu.pipeline_mode<synchronous>, transform_indices = @transform_9, window_bounds = array<i64: 32, 32>}, {pipeline_mode = #tpu.pipeline_mode<synchronous>, transform_indices = @transform_10, window_bounds = array<i64: 1, 32>}, {pipeline_mode = #tpu.pipeline_mode<synchronous>, transform_indices = @transform_11, window_bounds = array<i64: 32, 96>}, {pipeline_mode = #tpu.pipeline_mode<synchronous>, transform_indices = @transform_12, window_bounds = array<i64: 1, 96>}, {pipeline_mode = #tpu.pipeline_mode<synchronous>, transform_indices = @transform_13, window_bounds = array<i64: 32, 32>}, {pipeline_mode = #tpu.pipeline_mode<synchronous>, transform_indices = @transform_14, window_bounds = array<i64: 1, 32>}, {pipeline_mode = #tpu.pipeline_mode<synchronous>, transform_indices = @transform_15, window_bounds = array<i64: 32, 10>}, {pipeline_mode = #tpu.pipeline_mode<synchronous>, transform_indices = @transform_16, window_bounds = array<i64: 1, 10>}, {pipeline_mode = #tpu.pipeline_mode<synchronous>, transform_indices = @transform_17, window_bounds = array<i64: 10, 3>}, {pipeline_mode = #tpu.pipeline_mode<synchronous>, transform_indices = @transform_18, window_bounds = array<i64: 1, 3>}, {pipeline_mode = #tpu.pipeline_mode<synchronous>, transform_indices = @transform_19, window_bounds = array<i64: 4, 3>}]} {
    %c0 = arith.constant 0 : index
    %c0_0 = arith.constant 0 : index
    %0 = vector.load %arg2[%c0, %c0_0] : memref<64x64xi8, #tpu.memory_space<vmem>>, vector<64x64xi8>
    %1 = arith.sitofp %0 : vector<64x64xi8> to vector<64x64xbf16>
    %c0_1 = arith.constant 0 : index
    %c0_2 = arith.constant 0 : index
    %2 = vector.load %arg1[%c0_1, %c0_2] : memref<64x4xf32, #tpu.memory_space<vmem>>, vector<64x4xf32>
    %3 = arith.truncf %2 : vector<64x4xf32> to vector<64x4xbf16>
    %cst = arith.constant dense<0.000000e+00> : vector<64x4xf32>
    %4 = tpu.matmul %1, %3, %cst {dimension_numbers = #tpu.dot_dimension_numbers<[1], [0], [0], [1], [0, 0, 1, 1], [], []>} : vector<64x64xbf16>, vector<64x4xbf16>, vector<64x4xf32> -> vector<64x4xf32>
    %c0_3 = arith.constant 0 : index
    %c0_4 = arith.constant 0 : index
    %5 = vector.load %arg4[%c0_3, %c0_4] : memref<4x96xf32, #tpu.memory_space<vmem>>, vector<4x96xf32>
    %6 = arith.truncf %5 : vector<4x96xf32> to vector<4x96xbf16>
    %cst_5 = arith.constant dense<0.000000e+00> : vector<64x96xf32>
    %7 = tpu.matmul %3, %6, %cst_5 {dimension_numbers = #tpu.dot_dimension_numbers<[1], [0], [0], [1], [0, 0, 1, 1], [], []>} : vector<64x4xbf16>, vector<4x96xbf16>, vector<64x96xf32> -> vector<64x96xf32>
    %c0_6 = arith.constant 0 : index
    %c0_7 = arith.constant 0 : index
    %8 = vector.load %arg5[%c0_6, %c0_7] : memref<1x96xf32, #tpu.memory_space<vmem>>, vector<1x96xf32>
    %9 = vector.broadcast %8 : vector<1x96xf32> to vector<64x96xf32>
    %10 = arith.addf %7, %9 : vector<64x96xf32>
    %11 = arith.truncf %4 : vector<64x4xf32> to vector<64x4xbf16>
    %c0_8 = arith.constant 0 : index
    %c0_9 = arith.constant 0 : index
    %12 = vector.load %arg6[%c0_8, %c0_9] : memref<4x32xf32, #tpu.memory_space<vmem>>, vector<4x32xf32>
    %13 = arith.truncf %12 : vector<4x32xf32> to vector<4x32xbf16>
    %cst_10 = arith.constant dense<0.000000e+00> : vector<64x32xf32>
    %14 = tpu.matmul %11, %13, %cst_10 {dimension_numbers = #tpu.dot_dimension_numbers<[1], [0], [0], [1], [0, 0, 1, 1], [], []>} : vector<64x4xbf16>, vector<4x32xbf16>, vector<64x32xf32> -> vector<64x32xf32>
    %c0_11 = arith.constant 0 : index
    %c0_12 = arith.constant 0 : index
    %15 = vector.load %arg7[%c0_11, %c0_12] : memref<1x32xf32, #tpu.memory_space<vmem>>, vector<1x32xf32>
    %16 = vector.broadcast %15 : vector<1x32xf32> to vector<64x32xf32>
    %17 = arith.addf %14, %16 : vector<64x32xf32>
    %18 = vector.extract_strided_slice %10 {offsets = [0, 0], sizes = [64, 32], strides = [1, 1]} : vector<64x96xf32> to vector<64x32xf32>
    %19 = vector.extract_strided_slice %10 {offsets = [0, 32], sizes = [64, 32], strides = [1, 1]} : vector<64x96xf32> to vector<64x32xf32>
    %20 = vector.extract_strided_slice %10 {offsets = [0, 64], sizes = [64, 32], strides = [1, 1]} : vector<64x96xf32> to vector<64x32xf32>
    %21 = arith.addf %18, %17 : vector<64x32xf32>
    %22 = arith.mulf %19, %20 : vector<64x32xf32>
    %23 = arith.addf %21, %22 : vector<64x32xf32>
    %cst_13 = arith.constant 0.000000e+00 : f32
    %24 = vector.broadcast %cst_13 : f32 to vector<64x32xf32>
    %25 = arith.maximumf %23, %24 : vector<64x32xf32>
    %26 = arith.truncf %25 : vector<64x32xf32> to vector<64x32xbf16>
    %cst_14 = arith.constant dense<0.000000e+00> : vector<64x32xf32>
    %27 = tpu.matmul %1, %26, %cst_14 {dimension_numbers = #tpu.dot_dimension_numbers<[1], [0], [0], [1], [0, 0, 1, 1], [], []>} : vector<64x64xbf16>, vector<64x32xbf16>, vector<64x32xf32> -> vector<64x32xf32>
    %c0_15 = arith.constant 0 : index
    %c0_16 = arith.constant 0 : index
    %28 = vector.load %arg8[%c0_15, %c0_16] : memref<32x96xf32, #tpu.memory_space<vmem>>, vector<32x96xf32>
    %29 = arith.truncf %28 : vector<32x96xf32> to vector<32x96xbf16>
    %cst_17 = arith.constant dense<0.000000e+00> : vector<64x96xf32>
    %30 = tpu.matmul %26, %29, %cst_17 {dimension_numbers = #tpu.dot_dimension_numbers<[1], [0], [0], [1], [0, 0, 1, 1], [], []>} : vector<64x32xbf16>, vector<32x96xbf16>, vector<64x96xf32> -> vector<64x96xf32>
    %c0_18 = arith.constant 0 : index
    %c0_19 = arith.constant 0 : index
    %31 = vector.load %arg9[%c0_18, %c0_19] : memref<1x96xf32, #tpu.memory_space<vmem>>, vector<1x96xf32>
    %32 = vector.broadcast %31 : vector<1x96xf32> to vector<64x96xf32>
    %33 = arith.addf %30, %32 : vector<64x96xf32>
    %34 = arith.truncf %27 : vector<64x32xf32> to vector<64x32xbf16>
    %c0_20 = arith.constant 0 : index
    %c0_21 = arith.constant 0 : index
    %35 = vector.load %arg10[%c0_20, %c0_21] : memref<32x32xf32, #tpu.memory_space<vmem>>, vector<32x32xf32>
    %36 = arith.truncf %35 : vector<32x32xf32> to vector<32x32xbf16>
    %cst_22 = arith.constant dense<0.000000e+00> : vector<64x32xf32>
    %37 = tpu.matmul %34, %36, %cst_22 {dimension_numbers = #tpu.dot_dimension_numbers<[1], [0], [0], [1], [0, 0, 1, 1], [], []>} : vector<64x32xbf16>, vector<32x32xbf16>, vector<64x32xf32> -> vector<64x32xf32>
    %c0_23 = arith.constant 0 : index
    %c0_24 = arith.constant 0 : index
    %38 = vector.load %arg11[%c0_23, %c0_24] : memref<1x32xf32, #tpu.memory_space<vmem>>, vector<1x32xf32>
    %39 = vector.broadcast %38 : vector<1x32xf32> to vector<64x32xf32>
    %40 = arith.addf %37, %39 : vector<64x32xf32>
    %41 = vector.extract_strided_slice %33 {offsets = [0, 0], sizes = [64, 32], strides = [1, 1]} : vector<64x96xf32> to vector<64x32xf32>
    %42 = vector.extract_strided_slice %33 {offsets = [0, 32], sizes = [64, 32], strides = [1, 1]} : vector<64x96xf32> to vector<64x32xf32>
    %43 = vector.extract_strided_slice %33 {offsets = [0, 64], sizes = [64, 32], strides = [1, 1]} : vector<64x96xf32> to vector<64x32xf32>
    %44 = arith.addf %41, %40 : vector<64x32xf32>
    %45 = arith.mulf %42, %43 : vector<64x32xf32>
    %46 = arith.addf %44, %45 : vector<64x32xf32>
    %cst_25 = arith.constant 0.000000e+00 : f32
    %47 = vector.broadcast %cst_25 : f32 to vector<64x32xf32>
    %48 = arith.maximumf %46, %47 : vector<64x32xf32>
    %49 = arith.truncf %48 : vector<64x32xf32> to vector<64x32xbf16>
    %cst_26 = arith.constant dense<0.000000e+00> : vector<64x32xf32>
    %50 = tpu.matmul %1, %49, %cst_26 {dimension_numbers = #tpu.dot_dimension_numbers<[1], [0], [0], [1], [0, 0, 1, 1], [], []>} : vector<64x64xbf16>, vector<64x32xbf16>, vector<64x32xf32> -> vector<64x32xf32>
    %c0_27 = arith.constant 0 : index
    %c0_28 = arith.constant 0 : index
    %51 = vector.load %arg12[%c0_27, %c0_28] : memref<32x96xf32, #tpu.memory_space<vmem>>, vector<32x96xf32>
    %52 = arith.truncf %51 : vector<32x96xf32> to vector<32x96xbf16>
    %cst_29 = arith.constant dense<0.000000e+00> : vector<64x96xf32>
    %53 = tpu.matmul %49, %52, %cst_29 {dimension_numbers = #tpu.dot_dimension_numbers<[1], [0], [0], [1], [0, 0, 1, 1], [], []>} : vector<64x32xbf16>, vector<32x96xbf16>, vector<64x96xf32> -> vector<64x96xf32>
    %c0_30 = arith.constant 0 : index
    %c0_31 = arith.constant 0 : index
    %54 = vector.load %arg13[%c0_30, %c0_31] : memref<1x96xf32, #tpu.memory_space<vmem>>, vector<1x96xf32>
    %55 = vector.broadcast %54 : vector<1x96xf32> to vector<64x96xf32>
    %56 = arith.addf %53, %55 : vector<64x96xf32>
    %57 = arith.truncf %50 : vector<64x32xf32> to vector<64x32xbf16>
    %c0_32 = arith.constant 0 : index
    %c0_33 = arith.constant 0 : index
    %58 = vector.load %arg14[%c0_32, %c0_33] : memref<32x32xf32, #tpu.memory_space<vmem>>, vector<32x32xf32>
    %59 = arith.truncf %58 : vector<32x32xf32> to vector<32x32xbf16>
    %cst_34 = arith.constant dense<0.000000e+00> : vector<64x32xf32>
    %60 = tpu.matmul %57, %59, %cst_34 {dimension_numbers = #tpu.dot_dimension_numbers<[1], [0], [0], [1], [0, 0, 1, 1], [], []>} : vector<64x32xbf16>, vector<32x32xbf16>, vector<64x32xf32> -> vector<64x32xf32>
    %c0_35 = arith.constant 0 : index
    %c0_36 = arith.constant 0 : index
    %61 = vector.load %arg15[%c0_35, %c0_36] : memref<1x32xf32, #tpu.memory_space<vmem>>, vector<1x32xf32>
    %62 = vector.broadcast %61 : vector<1x32xf32> to vector<64x32xf32>
    %63 = arith.addf %60, %62 : vector<64x32xf32>
    %64 = vector.extract_strided_slice %56 {offsets = [0, 0], sizes = [64, 32], strides = [1, 1]} : vector<64x96xf32> to vector<64x32xf32>
    %65 = vector.extract_strided_slice %56 {offsets = [0, 32], sizes = [64, 32], strides = [1, 1]} : vector<64x96xf32> to vector<64x32xf32>
    %66 = vector.extract_strided_slice %56 {offsets = [0, 64], sizes = [64, 32], strides = [1, 1]} : vector<64x96xf32> to vector<64x32xf32>
    %67 = arith.addf %64, %63 : vector<64x32xf32>
    %68 = arith.mulf %65, %66 : vector<64x32xf32>
    %69 = arith.addf %67, %68 : vector<64x32xf32>
    %cst_37 = arith.constant 0.000000e+00 : f32
    %70 = vector.broadcast %cst_37 : f32 to vector<64x32xf32>
    %71 = arith.maximumf %69, %70 : vector<64x32xf32>
    %c0_38 = arith.constant 0 : index
    %c0_39 = arith.constant 0 : index
    %72 = vector.load %arg3[%c0_38, %c0_39] : memref<4x64xf32, #tpu.memory_space<vmem>>, vector<4x64xf32>
    %cst_40 = arith.constant dense<0.000000e+00> : vector<4x32xf32>
    %73 = tpu.matmul %72, %71, %cst_40 {dimension_numbers = #tpu.dot_dimension_numbers<[1], [0], [0], [1], [0, 0, 1, 1], [], []>} : vector<4x64xf32>, vector<64x32xf32>, vector<4x32xf32> -> vector<4x32xf32>
    %c0_41 = arith.constant 0 : index
    %c0_42 = arith.constant 0 : index
    %74 = vector.load %arg16[%c0_41, %c0_42] : memref<32x10xf32, #tpu.memory_space<vmem>>, vector<32x10xf32>
    %cst_43 = arith.constant dense<0.000000e+00> : vector<4x10xf32>
    %75 = tpu.matmul %73, %74, %cst_43 {dimension_numbers = #tpu.dot_dimension_numbers<[1], [0], [0], [1], [0, 0, 1, 1], [], []>} : vector<4x32xf32>, vector<32x10xf32>, vector<4x10xf32> -> vector<4x10xf32>
    %c0_44 = arith.constant 0 : index
    %c0_45 = arith.constant 0 : index
    %76 = vector.load %arg17[%c0_44, %c0_45] : memref<1x10xf32, #tpu.memory_space<vmem>>, vector<1x10xf32>
    %77 = vector.broadcast %76 : vector<1x10xf32> to vector<4x10xf32>
    %78 = arith.addf %75, %77 : vector<4x10xf32>
    %c0_46 = arith.constant 0 : index
    %c0_47 = arith.constant 0 : index
    %79 = vector.load %arg18[%c0_46, %c0_47] : memref<10x3xf32, #tpu.memory_space<vmem>>, vector<10x3xf32>
    %cst_48 = arith.constant dense<0.000000e+00> : vector<4x3xf32>
    %80 = tpu.matmul %78, %79, %cst_48 {dimension_numbers = #tpu.dot_dimension_numbers<[1], [0], [0], [1], [0, 0, 1, 1], [], []>} : vector<4x10xf32>, vector<10x3xf32>, vector<4x3xf32> -> vector<4x3xf32>
    %c0_49 = arith.constant 0 : index
    %c0_50 = arith.constant 0 : index
    %81 = vector.load %arg19[%c0_49, %c0_50] : memref<1x3xf32, #tpu.memory_space<vmem>>, vector<1x3xf32>
    %82 = vector.broadcast %81 : vector<1x3xf32> to vector<4x3xf32>
    %83 = arith.addf %80, %82 : vector<4x3xf32>
    %c0_51 = arith.constant 0 : index
    %c0_52 = arith.constant 0 : index
    %84 = vector.load %arg20[%c0_51, %c0_52] : memref<4x3xf32, #tpu.memory_space<vmem>>, vector<4x3xf32>
    tpu.vector_store %arg20[%c0_51, %c0_52], %83 {strides = array<i32>} : memref<4x3xf32, #tpu.memory_space<vmem>>, vector<4x3xf32>,
    return
  }
  func.func @transform_0(%arg0: i32) -> (i32, i32) {
    %c0_i32 = arith.constant 0 : i32
    %c0_i32_0 = arith.constant 0 : i32
    %c0_i32_1 = arith.constant 0 : i32
    return %c0_i32, %c0_i32_0 : i32, i32
  }
  func.func @transform_1(%arg0: i32) -> (i32, i32) {
    %c0_i32 = arith.constant 0 : i32
    %c0_i32_0 = arith.constant 0 : i32
    %c0_i32_1 = arith.constant 0 : i32
    return %c0_i32, %c0_i32_0 : i32, i32
  }
  func.func @transform_2(%arg0: i32) -> (i32, i32) {
    %c0_i32 = arith.constant 0 : i32
    %c0_i32_0 = arith.constant 0 : i32
    %c0_i32_1 = arith.constant 0 : i32
    return %c0_i32, %c0_i32_0 : i32, i32
  }
  func.func @transform_3(%arg0: i32) -> (i32, i32) {
    %c0_i32 = arith.constant 0 : i32
    %c0_i32_0 = arith.constant 0 : i32
    %c0_i32_1 = arith.constant 0 : i32
    return %c0_i32, %c0_i32_0 : i32, i32
  }
  func.func @transform_4(%arg0: i32) -> (i32, i32) {
    %c0_i32 = arith.constant 0 : i32
    %c0_i32_0 = arith.constant 0 : i32
    %c0_i32_1 = arith.constant 0 : i32
    return %c0_i32, %c0_i32_0 : i32, i32
  }
  func.func @transform_5(%arg0: i32) -> (i32, i32) {
    %c0_i32 = arith.constant 0 : i32
    %c0_i32_0 = arith.constant 0 : i32
    %c0_i32_1 = arith.constant 0 : i32
    return %c0_i32, %c0_i32_0 : i32, i32
  }
  func.func @transform_6(%arg0: i32) -> (i32, i32) {
    %c0_i32 = arith.constant 0 : i32
    %c0_i32_0 = arith.constant 0 : i32
    %c0_i32_1 = arith.constant 0 : i32
    return %c0_i32, %c0_i32_0 : i32, i32
  }
  func.func @transform_7(%arg0: i32) -> (i32, i32) {
    %c0_i32 = arith.constant 0 : i32
    %c0_i32_0 = arith.constant 0 : i32
    %c0_i32_1 = arith.constant 0 : i32
    return %c0_i32, %c0_i32_0 : i32, i32
  }
  func.func @transform_8(%arg0: i32) -> (i32, i32) {
    %c0_i32 = arith.constant 0 : i32
    %c0_i32_0 = arith.constant 0 : i32
    %c0_i32_1 = arith.constant 0 : i32
    return %c0_i32, %c0_i32_0 : i32, i32
  }
  func.func @transform_9(%arg0: i32) -> (i32, i32) {
    %c0_i32 = arith.constant 0 : i32
    %c0_i32_0 = arith.constant 0 : i32
    %c0_i32_1 = arith.constant 0 : i32
    return %c0_i32, %c0_i32_0 : i32, i32
  }
  func.func @transform_10(%arg0: i32) -> (i32, i32) {
    %c0_i32 = arith.constant 0 : i32
    %c0_i32_0 = arith.constant 0 : i32
    %c0_i32_1 = arith.constant 0 : i32
    return %c0_i32, %c0_i32_0 : i32, i32
  }
  func.func @transform_11(%arg0: i32) -> (i32, i32) {
    %c0_i32 = arith.constant 0 : i32
    %c0_i32_0 = arith.constant 0 : i32
    %c0_i32_1 = arith.constant 0 : i32
    return %c0_i32, %c0_i32_0 : i32, i32
  }
  func.func @transform_12(%arg0: i32) -> (i32, i32) {
    %c0_i32 = arith.constant 0 : i32
    %c0_i32_0 = arith.constant 0 : i32
    %c0_i32_1 = arith.constant 0 : i32
    return %c0_i32, %c0_i32_0 : i32, i32
  }
  func.func @transform_13(%arg0: i32) -> (i32, i32) {
    %c0_i32 = arith.constant 0 : i32
    %c0_i32_0 = arith.constant 0 : i32
    %c0_i32_1 = arith.constant 0 : i32
    return %c0_i32, %c0_i32_0 : i32, i32
  }
  func.func @transform_14(%arg0: i32) -> (i32, i32) {
    %c0_i32 = arith.constant 0 : i32
    %c0_i32_0 = arith.constant 0 : i32
    %c0_i32_1 = arith.constant 0 : i32
    return %c0_i32, %c0_i32_0 : i32, i32
  }
  func.func @transform_15(%arg0: i32) -> (i32, i32) {
    %c0_i32 = arith.constant 0 : i32
    %c0_i32_0 = arith.constant 0 : i32
    %c0_i32_1 = arith.constant 0 : i32
    return %c0_i32, %c0_i32_0 : i32, i32
  }
  func.func @transform_16(%arg0: i32) -> (i32, i32) {
    %c0_i32 = arith.constant 0 : i32
    %c0_i32_0 = arith.constant 0 : i32
    %c0_i32_1 = arith.constant 0 : i32
    return %c0_i32, %c0_i32_0 : i32, i32
  }
  func.func @transform_17(%arg0: i32) -> (i32, i32) {
    %c0_i32 = arith.constant 0 : i32
    %c0_i32_0 = arith.constant 0 : i32
    %c0_i32_1 = arith.constant 0 : i32
    return %c0_i32, %c0_i32_0 : i32, i32
  }
  func.func @transform_18(%arg0: i32) -> (i32, i32) {
    %c0_i32 = arith.constant 0 : i32
    %c0_i32_0 = arith.constant 0 : i32
    %c0_i32_1 = arith.constant 0 : i32
    return %c0_i32, %c0_i32_0 : i32, i32
  }
  func.func @transform_19(%arg0: i32) -> (i32, i32) {
    %c0_i32 = arith.constant 0 : i32
    %c0_i32_0 = arith.constant 0 : i32
    %c0_i32_1 = arith.constant 0 : i32
    return %c0_i32, %c0_i32_0 : i32, i32
  }
}

</mosaic_0001>

<llo_original>
// kernel: tpu_custom_call.1
$region0: #{tpu_custom_call.1}
  #allocation0 [shape = 'u32[]', space=smem, size = 0x4, offset = 0x4, fixed_abs, tag = 'smem constant byte address 0x4 - core index']
  #allocation1 [shape = 'u32[72,128]{1,0:T(1,128)}', space=vmem, size = 0x9000, scoped, tag = 'internal scratch']
  %s0 = inlined_call_operand.vmem [shape: f32[64,4], index: 0, kind: input, shape index: {}]
  %s1 = inlined_call_operand.hbm [shape: s8[64,64], index: 1, kind: input, shape index: {}]
  %s2 = inlined_call_operand.hbm [shape: f32[4,64], index: 2, kind: input, shape index: {}]
  %s3 = inlined_call_operand.hbm [shape: f32[4,96], index: 3, kind: input, shape index: {}]
  %s4 = inlined_call_operand.hbm [shape: f32[1,96], index: 4, kind: input, shape index: {}]
  %s5 = inlined_call_operand.hbm [shape: f32[4,32], index: 5, kind: input, shape index: {}]
  %s6 = inlined_call_operand.hbm [shape: f32[1,32], index: 6, kind: input, shape index: {}]
  %s7 = inlined_call_operand.vmem [shape: f32[32,96], index: 7, kind: input, shape index: {}]
  %s8 = inlined_call_operand.hbm [shape: f32[1,96], index: 8, kind: input, shape index: {}]
  %s9 = inlined_call_operand.vmem [shape: f32[32,32], index: 9, kind: input, shape index: {}]
  %s10 = inlined_call_operand.hbm [shape: f32[1,32], index: 10, kind: input, shape index: {}]
  %s11 = inlined_call_operand.vmem [shape: f32[32,96], index: 11, kind: input, shape index: {}]
  %s12 = inlined_call_operand.hbm [shape: f32[1,96], index: 12, kind: input, shape index: {}]
  %s13 = inlined_call_operand.vmem [shape: f32[32,32], index: 13, kind: input, shape index: {}]
  %s14 = inlined_call_operand.vmem [shape: f32[1,32], index: 14, kind: input, shape index: {}]
  %s15 = inlined_call_operand.vmem [shape: f32[32,10], index: 15, kind: input, shape index: {}]
  %s16 = inlined_call_operand.vmem [shape: f32[1,10], index: 16, kind: input, shape index: {}]
  %s17 = inlined_call_operand.vmem [shape: f32[10,3], index: 17, kind: input, shape index: {}]
  %s18 = inlined_call_operand.vmem [shape: f32[1,3], index: 18, kind: input, shape index: {}]
  %s19 = inlined_call_operand.hbm [shape: f32[4,3], index: 19, kind: output, shape index: {}]
  %s20 = sld [smem:[#allocation0]]
  $region122: #{tpu_custom_call.1} parent=0
    _
  %s22 = ssub.s32 1, %s20
  %s23 = scalar_select 0, %s22, %s20
  $region1: #{tpu_custom_call.1} parent=0
    #allocation2 [shape = 'u8[8192]{0}', space=vmem, size = 0x2000, scoped, tag = 'input window, operand 1, single buffered']
    #allocation3 [shape = 's32[1]{0}', space=sflag, size = 0x4, scoped, tag = 'scoped memory for tpu_custom_call.1']
    #allocation4 [shape = 's32[1]{0}', space=sflag, size = 0x4, scoped, tag = 'scoped memory for tpu_custom_call.1']
    #allocation5 [shape = 'u8[2048]{0}', space=vmem, size = 0x800, scoped, tag = 'input window, operand 2, single buffered']
    #allocation6 [shape = 's32[1]{0}', space=sflag, size = 0x4, scoped, tag = 'scoped memory for tpu_custom_call.1']
    #allocation7 [shape = 'u8[2048]{0}', space=vmem, size = 0x800, scoped, tag = 'input window, operand 3, single buffered']
    #allocation8 [shape = 'u8[512]{0}', space=vmem, size = 0x400, scoped, tag = 'input window, operand 4, single buffered']
    #allocation9 [shape = 's32[1]{0}', space=sflag, size = 0x4, scoped, tag = 'scoped memory for tpu_custom_call.1']
    #allocation10 [shape = 'u8[2048]{0}', space=vmem, size = 0x800, scoped, tag = 'input window, operand 5, single buffered']
    #allocation11 [shape = 'u8[512]{0}', space=vmem, size = 0x400, scoped, tag = 'input window, operand 6, single buffered']
    #allocation12 [shape = 's32[1]{0}', space=sflag, size = 0x4, scoped, tag = 'scoped memory for tpu_custom_call.1']
    #allocation13 [shape = 'u8[512]{0}', space=vmem, size = 0x400, scoped, tag = 'input window, operand 8, single buffered']
    #allocation14 [shape = 'u8[512]{0}', space=vmem, size = 0x400, scoped, tag = 'input window, operand 10, single buffered']
    #allocation15 [shape = 's32[1]{0}', space=sflag, size = 0x4, scoped, tag = 'scoped memory for tpu_custom_call.1']
    #allocation16 [shape = 'u8[512]{0}', space=vmem, size = 0x400, scoped, tag = 'input window, operand 12, single buffered']
    #allocation17 [shape = 'u8[2048]{0}', space=vmem, size = 0x800, scoped, tag = 'output window, operand 0, single buffered']
    %24 = vsyncpa [#allocation3], 0
    %25 = vsyncpa [#allocation6], 0
    %26 = vsyncpa [#allocation9], 0
    %27 = vsyncpa [#allocation12], 0
    %28 = vsyncpa [#allocation15], 0
    %29 = vsyncpa [#allocation4], 0
    // Predicated region
    $region2: #{tpu_custom_call.1} parent=1 // pred_check
      _
    $region3: #{tpu_custom_call.1} parent=1 // pred_check_branch
      %31 = sbr.rel (0) target = $region5
    $region4: #{tpu_custom_call.1} parent=1 // pred_region
      _
    $region5: #{tpu_custom_call.1} parent=1 // pred_fallthru
      _
    // Predicated region
    $region6: #{tpu_custom_call.1} parent=1 // pred_check
      _
    $region7: #{tpu_custom_call.1} parent=1 // pred_check_branch
      %33 = sbr.rel (0) target = $region9
    $region8: #{tpu_custom_call.1} parent=1 // pred_region
      %35 = vsyncadd [#allocation3], 0
      %s36 = sshll.u32 %s1, 4
      %s37 = int_to_ptr.hbm [resolvable:$true] %s36
      %s38 = sshll.u32 [#allocation2], 4
      %s39 = int_to_ptr.vmem [resolvable:$true] %s38
      %44 = dma.hbm_to_vmem [thread:$0]  %s37, 256, %s39, [#allocation3], 128, 128, 8
    $region9: #{tpu_custom_call.1} parent=1 // pred_fallthru
      _
    // Predicated region
    $region10: #{tpu_custom_call.1} parent=1 // pred_check
      _
    $region11: #{tpu_custom_call.1} parent=1 // pred_check_branch
      %46 = sbr.rel (0) target = $region13
    $region12: #{tpu_custom_call.1} parent=1 // pred_region
      %48 = vsyncadd [#allocation6], 0
      %s50 = sshll.u32 %s2, 4
      %s51 = int_to_ptr.hbm [resolvable:$true] %s50
      %s52 = sshll.u32 [#allocation5], 4
      %s53 = int_to_ptr.vmem [resolvable:$true] %s52
      %55 = dma.hbm_to_vmem [thread:$0]  %s51, 64, %s53, [#allocation6]
    $region13: #{tpu_custom_call.1} parent=1 // pred_fallthru
      _
    // Predicated region
    $region14: #{tpu_custom_call.1} parent=1 // pred_check
      _
    $region15: #{tpu_custom_call.1} parent=1 // pred_check_branch
      %57 = sbr.rel (0) target = $region17
    $region16: #{tpu_custom_call.1} parent=1 // pred_region
      %59 = vsyncadd [#allocation6], 0
      %s61 = sshll.u32 %s3, 4
      %s62 = int_to_ptr.hbm [resolvable:$true] %s61
      %s63 = sshll.u32 [#allocation7], 4
      %s64 = int_to_ptr.vmem [resolvable:$true] %s63
      %66 = dma.hbm_to_vmem [thread:$0]  %s62, 64, %s64, [#allocation6]
    $region17: #{tpu_custom_call.1} parent=1 // pred_fallthru
      _
    // Predicated region
    $region18: #{tpu_custom_call.1} parent=1 // pred_check
      _
    $region19: #{tpu_custom_call.1} parent=1 // pred_check_branch
      %68 = sbr.rel (0) target = $region21
    $region20: #{tpu_custom_call.1} parent=1 // pred_region
      %70 = vsyncadd [#allocation9], 0
      %s72 = sshll.u32 %s4, 4
      %s73 = int_to_ptr.hbm [resolvable:$true] %s72
      %s74 = sshll.u32 [#allocation8], 4
      %s75 = int_to_ptr.vmem [resolvable:$true] %s74
      %77 = dma.hbm_to_vmem [thread:$0]  %s73, 16, %s75, [#allocation9]
    $region21: #{tpu_custom_call.1} parent=1 // pred_fallthru
      _
    // Predicated region
    $region22: #{tpu_custom_call.1} parent=1 // pred_check
      _
    $region23: #{tpu_custom_call.1} parent=1 // pred_check_branch
      %79 = sbr.rel (0) target = $region25
    $region24: #{tpu_custom_call.1} parent=1 // pred_region
      %81 = vsyncadd [#allocation9], 0
      %s83 = sshll.u32 %s5, 4
      %s84 = int_to_ptr.hbm [resolvable:$true] %s83
      %s85 = sshll.u32 [#allocation10], 4
      %s86 = int_to_ptr.vmem [resolvable:$true] %s85
      %88 = dma.hbm_to_vmem [thread:$0]  %s84, 64, %s86, [#allocation9]
    $region25: #{tpu_custom_call.1} parent=1 // pred_fallthru
      _
    // Predicated region
    $region26: #{tpu_custom_call.1} parent=1 // pred_check
      _
    $region27: #{tpu_custom_call.1} parent=1 // pred_check_branch
      %90 = sbr.rel (0) target = $region29
    $region28: #{tpu_custom_call.1} parent=1 // pred_region
      %92 = vsyncadd [#allocation12], 0
      %s94 = sshll.u32 %s6, 4
      %s95 = int_to_ptr.hbm [resolvable:$true] %s94
      %s96 = sshll.u32 [#allocation11], 4
      %s97 = int_to_ptr.vmem [resolvable:$true] %s96
      %99 = dma.hbm_to_vmem [thread:$0]  %s95, 16, %s97, [#allocation12]
    $region29: #{tpu_custom_call.1} parent=1 // pred_fallthru
      _
    // Predicated region
    $region30: #{tpu_custom_call.1} parent=1 // pred_check
      _
    $region31: #{tpu_custom_call.1} parent=1 // pred_check_branch
      %101 = sbr.rel (0) target = $region33
    $region32: #{tpu_custom_call.1} parent=1 // pred_region
      _
    $region33: #{tpu_custom_call.1} parent=1 // pred_fallthru
      _
    // Predicated region
    $region34: #{tpu_custom_call.1} parent=1 // pred_check
      _
    $region35: #{tpu_custom_call.1} parent=1 // pred_check_branch
      %103 = sbr.rel (0) target = $region37
    $region36: #{tpu_custom_call.1} parent=1 // pred_region
      %105 = vsyncadd [#allocation12], 0
      %s107 = sshll.u32 %s8, 4
      %s108 = int_to_ptr.hbm [resolvable:$true] %s107
      %s109 = sshll.u32 [#allocation13], 4
      %s110 = int_to_ptr.vmem [resolvable:$true] %s109
      %112 = dma.hbm_to_vmem [thread:$0]  %s108, 16, %s110, [#allocation12]
    $region37: #{tpu_custom_call.1} parent=1 // pred_fallthru
      _
    // Predicated region
    $region38: #{tpu_custom_call.1} parent=1 // pred_check
      _
    $region39: #{tpu_custom_call.1} parent=1 // pred_check_branch
      %114 = sbr.rel (0) target = $region41
    $region40: #{tpu_custom_call.1} parent=1 // pred_region
      _
    $region41: #{tpu_custom_call.1} parent=1 // pred_fallthru
      _
    // Predicated region
    $region42: #{tpu_custom_call.1} parent=1 // pred_check
      _
    $region43: #{tpu_custom_call.1} parent=1 // pred_check_branch
      %116 = sbr.rel (0) target = $region45
    $region44: #{tpu_custom_call.1} parent=1 // pred_region
      %118 = vsyncadd [#allocation15], 0
      %s120 = sshll.u32 %s10, 4
      %s121 = int_to_ptr.hbm [resolvable:$true] %s120
      %s122 = sshll.u32 [#allocation14], 4
      %s123 = int_to_ptr.vmem [resolvable:$true] %s122
      %125 = dma.hbm_to_vmem [thread:$0]  %s121, 16, %s123, [#allocation15]
    $region45: #{tpu_custom_call.1} parent=1 // pred_fallthru
      _
    // Predicated region
    $region46: #{tpu_custom_call.1} parent=1 // pred_check
      _
    $region47: #{tpu_custom_call.1} parent=1 // pred_check_branch
      %127 = sbr.rel (0) target = $region49
    $region48: #{tpu_custom_call.1} parent=1 // pred_region
      _
    $region49: #{tpu_custom_call.1} parent=1 // pred_fallthru
      _
    // Predicated region
    $region50: #{tpu_custom_call.1} parent=1 // pred_check
      _
    $region51: #{tpu_custom_call.1} parent=1 // pred_check_branch
      %129 = sbr.rel (0) target = $region53
    $region52: #{tpu_custom_call.1} parent=1 // pred_region
      %131 = vsyncadd [#allocation15], 0
      %s133 = sshll.u32 %s12, 4
      %s134 = int_to_ptr.hbm [resolvable:$true] %s133
      %s135 = sshll.u32 [#allocation16], 4
      %s136 = int_to_ptr.vmem [resolvable:$true] %s135
      %138 = dma.hbm_to_vmem [thread:$0]  %s134, 16, %s136, [#allocation15]
    $region53: #{tpu_custom_call.1} parent=1 // pred_fallthru
      _
    // Predicated region
    $region54: #{tpu_custom_call.1} parent=1 // pred_check
      _
    $region55: #{tpu_custom_call.1} parent=1 // pred_check_branch
      %140 = sbr.rel (0) target = $region57
    $region56: #{tpu_custom_call.1} parent=1 // pred_region
      _
    $region57: #{tpu_custom_call.1} parent=1 // pred_fallthru
      _
    // Predicated region
    $region58: #{tpu_custom_call.1} parent=1 // pred_check
      _
    $region59: #{tpu_custom_call.1} parent=1 // pred_check_branch
      %142 = sbr.rel (0) target = $region61
    $region60: #{tpu_custom_call.1} parent=1 // pred_region
      _
    $region61: #{tpu_custom_call.1} parent=1 // pred_fallthru
      _
    // Predicated region
    $region62: #{tpu_custom_call.1} parent=1 // pred_check
      _
    $region63: #{tpu_custom_call.1} parent=1 // pred_check_branch
      %144 = sbr.rel (0) target = $region65
    $region64: #{tpu_custom_call.1} parent=1 // pred_region
      _
    $region65: #{tpu_custom_call.1} parent=1 // pred_fallthru
      _
    // Predicated region
    $region66: #{tpu_custom_call.1} parent=1 // pred_check
      _
    $region67: #{tpu_custom_call.1} parent=1 // pred_check_branch
      %146 = sbr.rel (0) target = $region69
    $region68: #{tpu_custom_call.1} parent=1 // pred_region
      _
    $region69: #{tpu_custom_call.1} parent=1 // pred_fallthru
      _
    // Predicated region
    $region70: #{tpu_custom_call.1} parent=1 // pred_check
      _
    $region71: #{tpu_custom_call.1} parent=1 // pred_check_branch
      %148 = sbr.rel (0) target = $region73
    $region72: #{tpu_custom_call.1} parent=1 // pred_region
      _
    $region73: #{tpu_custom_call.1} parent=1 // pred_fallthru
      _
    // Predicated region
    $region74: #{tpu_custom_call.1} parent=1 // pred_check
      _
    $region75: #{tpu_custom_call.1} parent=1 // pred_check_branch
      %150 = sbr.rel (0) target = $region77
    $region76: #{tpu_custom_call.1} parent=1 // pred_region
      _
    $region77: #{tpu_custom_call.1} parent=1 // pred_fallthru
      _
    // Predicated region
    $region78: #{tpu_custom_call.1} parent=1 // pred_check
      _
    $region79: #{tpu_custom_call.1} parent=1 // pred_check_branch
      %152 = sbr.rel (0) target = $region81
    $region80: #{tpu_custom_call.1} parent=1 // pred_region
      %154 = dma.done [#allocation3], 256
    $region81: #{tpu_custom_call.1} parent=1 // pred_fallthru
      _
    // Predicated region
    $region82: #{tpu_custom_call.1} parent=1 // pred_check
      _
    $region83: #{tpu_custom_call.1} parent=1 // pred_check_branch
      %156 = sbr.rel (0) target = $region85
    $region84: #{tpu_custom_call.1} parent=1 // pred_region
      %158 = dma.done [#allocation6], 64
    $region85: #{tpu_custom_call.1} parent=1 // pred_fallthru
      _
    // Predicated region
    $region86: #{tpu_custom_call.1} parent=1 // pred_check
      _
    $region87: #{tpu_custom_call.1} parent=1 // pred_check_branch
      %160 = sbr.rel (0) target = $region89
    $region88: #{tpu_custom_call.1} parent=1 // pred_region
      %162 = dma.done [#allocation6], 64
    $region89: #{tpu_custom_call.1} parent=1 // pred_fallthru
      _
    // Predicated region
    $region90: #{tpu_custom_call.1} parent=1 // pred_check
      _
    $region91: #{tpu_custom_call.1} parent=1 // pred_check_branch
      %164 = sbr.rel (0) target = $region93
    $region92: #{tpu_custom_call.1} parent=1 // pred_region
      %166 = dma.done [#allocation9], 16
    $region93: #{tpu_custom_call.1} parent=1 // pred_fallthru
      _
    // Predicated region
    $region94: #{tpu_custom_call.1} parent=1 // pred_check
      _
    $region95: #{tpu_custom_call.1} parent=1 // pred_check_branch
      %168 = sbr.rel (0) target = $region97
    $region96: #{tpu_custom_call.1} parent=1 // pred_region
      %170 = dma.done [#allocation9], 64
    $region97: #{tpu_custom_call.1} parent=1 // pred_fallthru
      _
    // Predicated region
    $region98: #{tpu_custom_call.1} parent=1 // pred_check
      _
    $region99: #{tpu_custom_call.1} parent=1 // pred_check_branch
      %172 = sbr.rel (0) target = $region101
    $region100: #{tpu_custom_call.1} parent=1 // pred_region
      %174 = dma.done [#allocation12], 16
    $region101: #{tpu_custom_call.1} parent=1 // pred_fallthru
      _
    // Predicated region
    $region102: #{tpu_custom_call.1} parent=1 // pred_check
      _
    $region103: #{tpu_custom_call.1} parent=1 // pred_check_branch
      %176 = sbr.rel (0) target = $region105
    $region104: #{tpu_custom_call.1} parent=1 // pred_region
      %178 = dma.done [#allocation12], 16
    $region105: #{tpu_custom_call.1} parent=1 // pred_fallthru
      _
    // Predicated region
    $region106: #{tpu_custom_call.1} parent=1 // pred_check
      _
    $region107: #{tpu_custom_call.1} parent=1 // pred_check_branch
      %180 = sbr.rel (0) target = $region109
    $region108: #{tpu_custom_call.1} parent=1 // pred_region
      %182 = dma.done [#allocation15], 16
    $region109: #{tpu_custom_call.1} parent=1 // pred_fallthru
      _
    // Predicated region
    $region110: #{tpu_custom_call.1} parent=1 // pred_check
      _
    $region111: #{tpu_custom_call.1} parent=1 // pred_check_branch
      %184 = sbr.rel (0) target = $region113
    $region112: #{tpu_custom_call.1} parent=1 // pred_region
      %186 = dma.done [#allocation15], 16
    $region113: #{tpu_custom_call.1} parent=1 // pred_fallthru
      _
    %v188 = vld [vmem:[#allocation2] sm:$0xff]
    %v189 = vld [vmem:[#allocation2 + $0x8] sm:$0xff]
    %v190 = vunpack.c.0.s8 %v188
    %v191 = vunpack.c.1.s8 %v188
    %v192 = vunpack.c.2.s8 %v188
    %v193 = vunpack.c.3.s8 %v188
    %v194 = vunpack.c.0.s8 %v189
    %v195 = vunpack.c.1.s8 %v189
    %v196 = vunpack.c.2.s8 %v189
    %v197 = vunpack.c.3.s8 %v189
    %v198 = vcvt.s32.f32 %v190
    %v199 = vcvt.s32.f32 %v191
    %v200 = vcvt.s32.f32 %v192
    %v201 = vcvt.s32.f32 %v193
    %v202 = vcvt.s32.f32 %v194
    %v203 = vcvt.s32.f32 %v195
    %v204 = vcvt.s32.f32 %v196
    %v205 = vcvt.s32.f32 %v197
    %v206 = vpack.c.bf16 %v199, %v198
    %v207 = vpack.c.bf16 %v201, %v200
    %v208 = vpack.c.bf16 %v203, %v202
    %v209 = vpack.c.bf16 %v205, %v204
    %v210 = vld [vmem:[%s0] sm:$0xff]
    %v211 = vld [vmem:[%s0 + $0x8] sm:$0xff]
    %v212 = vld [vmem:[%s0 + $0x10] sm:$0xff]
    %v213 = vld [vmem:[%s0 + $0x18] sm:$0xff]
    %v214 = vld [vmem:[%s0 + $0x20] sm:$0xff]
    %v215 = vld [vmem:[%s0 + $0x28] sm:$0xff]
    %v216 = vld [vmem:[%s0 + $0x30] sm:$0xff]
    %v217 = vld [vmem:[%s0 + $0x38] sm:$0xff]
    %v218 = vpack.c.bf16 %v211, %v210
    %v219 = vpack.c.bf16 %v213, %v212
    %v220 = vpack.c.bf16 %v215, %v214
    %v221 = vpack.c.bf16 %v217, %v216
    %vm222 = vcmask 523264
    %v224 = vsel %vm222, %v206, 0
    %v227 = vsel %vm222, %v207, 0
    %v230 = vsel %vm222, %v208, 0
    %v233 = vsel %vm222, %v209, 0
    %235 = vmatpush.bf16.msra.mxu0 0
    %236 = vmatpush.bf16.msra.mxu0 0
    %237 = vmatpush.bf16.msra.mxu0 0
    %238 = vmatpush.bf16.msra.mxu0 0
    %239 = vmatpush.bf16.msra.mxu0 %v221
    %240 = vmatpush.bf16.msra.mxu0 %v220
    %241 = vmatpush.bf16.msra.mxu0 %v219
    %242 = vmatpush.bf16.msra.mxu0 %v218
    %243 = vmatmul.bf16.gmra.mxu0 %v224
    %v244 = vpop.f32.mrf.mxu0
    %v245 = vadd.f32 0.0, %v244
    %v246 = vpop.f32.mrf.mxu0
    %v247 = vadd.f32 0.0, %v246
    %248 = vmatmul.bf16.gmra.mxu0 %v227
    %v249 = vpop.f32.mrf.mxu0
    %v250 = vadd.f32 0.0, %v249
    %v251 = vpop.f32.mrf.mxu0
    %v252 = vadd.f32 0.0, %v251
    %253 = vmatmul.bf16.gmra.mxu0 %v230
    %v254 = vpop.f32.mrf.mxu0
    %v255 = vadd.f32 0.0, %v254
    %v256 = vpop.f32.mrf.mxu0
    %v257 = vadd.f32 0.0, %v256
    %258 = vmatmul.bf16.gmra.mxu0 %v233
    %v259 = vpop.f32.mrf.mxu0
    %v260 = vadd.f32 0.0, %v259
    %v261 = vpop.f32.mrf.mxu0
    %v262 = vadd.f32 0.0, %v261
    %263 = vdwg.mxu0
    %v264 = vld [vmem:[#allocation7] sm:$0xf]
    %v265 = vpack.c.bf16 %v264, %v264
    %v266 = vld [vmem:[#allocation8] sm:$0x1]
    %v268 = vperm.slane %v266, 0
    %vm270 = vcmask 31744
    %v272 = vsel %vm270, %v218, 0
    %v275 = vsel %vm270, %v219, 0
    %v278 = vsel %vm270, %v220, 0
    %v281 = vsel %vm270, %v221, 0
    %vm283 = vcmask 1041408
    %v285 = vsel %vm283, %v265, 0
    %287 = vmatpush.bf16.msra.mxu0 0
    %288 = vmatpush.bf16.msra.mxu0 0
    %289 = vmatpush.bf16.msra.mxu0 0
    %290 = vmatpush.bf16.msra.mxu0 0
    %291 = vmatpush.bf16.msra.mxu0 0
    %292 = vmatpush.bf16.msra.mxu0 0
    %293 = vmatpush.bf16.msra.mxu0 0
    %294 = vmatpush.bf16.msra.mxu0 %v285
    %295 = vmatmul.bf16.gmra.mxu0 %v272
    %v296 = vpop.f32.mrf.mxu0
    %v297 = vadd.f32 %v268, %v296
    %v298 = vpop.f32.mrf.mxu0
    %v299 = vadd.f32 %v268, %v298
    %300 = vmatmul.bf16.gmra.mxu0 %v275
    %v301 = vpop.f32.mrf.mxu0
    %v302 = vadd.f32 %v268, %v301
    %v303 = vpop.f32.mrf.mxu0
    %v304 = vadd.f32 %v268, %v303
    %305 = vmatmul.bf16.gmra.mxu0 %v278
    %v306 = vpop.f32.mrf.mxu0
    %v307 = vadd.f32 %v268, %v306
    %v308 = vpop.f32.mrf.mxu0
    %v309 = vadd.f32 %v268, %v308
    %310 = vmatmul.bf16.gmra.mxu0 %v281
    %v311 = vpop.f32.mrf.mxu0
    %v312 = vadd.f32 %v268, %v311
    %v313 = vpop.f32.mrf.mxu0
    %v314 = vadd.f32 %v268, %v313
    %315 = vdwg.mxu0
    %v316 = vpack.c.bf16 %v247, %v245
    %v317 = vpack.c.bf16 %v252, %v250
    %v318 = vpack.c.bf16 %v257, %v255
    %v319 = vpack.c.bf16 %v262, %v260
    %v320 = vld [vmem:[#allocation10] sm:$0xf]
    %v321 = vpack.c.bf16 %v320, %v320
    %v322 = vld [vmem:[#allocation11] sm:$0x1]
    %v324 = vperm.slane %v322, 0
    %v327 = vsel %vm270, %v316, 0
    %v330 = vsel %vm270, %v317, 0
    %v333 = vsel %vm270, %v318, 0
    %v336 = vsel %vm270, %v319, 0
    %v339 = vsel %vm283, %v321, 0
    %341 = vmatpush.bf16.msra.mxu0 0
    %342 = vmatpush.bf16.msra.mxu0 0
    %343 = vmatpush.bf16.msra.mxu0 0
    %344 = vmatpush.bf16.msra.mxu0 0
    %345 = vmatpush.bf16.msra.mxu0 0
    %346 = vmatpush.bf16.msra.mxu0 0
    %347 = vmatpush.bf16.msra.mxu0 0
    %348 = vmatpush.bf16.msra.mxu0 %v339
    %349 = vmatmul.bf16.gmra.mxu0 %v327
    %v350 = vpop.f32.mrf.mxu0
    %v351 = vadd.f32 %v324, %v350
    %v352 = vpop.f32.mrf.mxu0
    %v353 = vadd.f32 %v324, %v352
    %354 = vmatmul.bf16.gmra.mxu0 %v330
    %v355 = vpop.f32.mrf.mxu0
    %v356 = vadd.f32 %v324, %v355
    %v357 = vpop.f32.mrf.mxu0
    %v358 = vadd.f32 %v324, %v357
    %359 = vmatmul.bf16.gmra.mxu0 %v333
    %v360 = vpop.f32.mrf.mxu0
    %v361 = vadd.f32 %v324, %v360
    %v362 = vpop.f32.mrf.mxu0
    %v363 = vadd.f32 %v324, %v362
    %364 = vmatmul.bf16.gmra.mxu0 %v336
    %v365 = vpop.f32.mrf.mxu0
    %v366 = vadd.f32 %v324, %v365
    %v367 = vpop.f32.mrf.mxu0
    %v368 = vadd.f32 %v324, %v367
    %369 = vdwg.mxu0
    %v370 = vadd.f32 %v297, %v351
    %v371 = vadd.f32 %v299, %v353
    %v372 = vadd.f32 %v302, %v356
    %v373 = vadd.f32 %v304, %v358
    %v374 = vadd.f32 %v307, %v361
    %v375 = vadd.f32 %v309, %v363
    %v376 = vadd.f32 %v312, %v366
    %v377 = vadd.f32 %v314, %v368
    %386 = vrot.lane.b32.xlu0 %v297, 96
    %v387 = vpop.permute.xlu0 %386
    %388 = vrot.lane.b32.xlu0 %v299, 96
    %v389 = vpop.permute.xlu0 %388
    %390 = vrot.lane.b32.xlu0 %v302, 96
    %v391 = vpop.permute.xlu0 %390
    %392 = vrot.lane.b32.xlu0 %v304, 96
    %v393 = vpop.permute.xlu0 %392
    %394 = vrot.lane.b32.xlu0 %v307, 96
    %v395 = vpop.permute.xlu0 %394
    %396 = vrot.lane.b32.xlu0 %v309, 96
    %v397 = vpop.permute.xlu0 %396
    %398 = vrot.lane.b32.xlu0 %v312, 96
    %v399 = vpop.permute.xlu0 %398
    %400 = vrot.lane.b32.xlu0 %v314, 96
    %v401 = vpop.permute.xlu0 %400
    %v410 = vmul.f32 %v297, %v387
    %v411 = vmul.f32 %v299, %v389
    %v412 = vmul.f32 %v302, %v391
    %v413 = vmul.f32 %v304, %v393
    %v414 = vmul.f32 %v307, %v395
    %v415 = vmul.f32 %v309, %v397
    %v416 = vmul.f32 %v312, %v399
    %v417 = vmul.f32 %v314, %v401
    %426 = vrot.lane.b32.xlu0 %v410, 96
    %v427 = vpop.permute.xlu0 %426
    %428 = vrot.lane.b32.xlu0 %v411, 96
    %v429 = vpop.permute.xlu0 %428
    %430 = vrot.lane.b32.xlu0 %v412, 96
    %v431 = vpop.permute.xlu0 %430
    %432 = vrot.lane.b32.xlu0 %v413, 96
    %v433 = vpop.permute.xlu0 %432
    %434 = vrot.lane.b32.xlu0 %v414, 96
    %v435 = vpop.permute.xlu0 %434
    %436 = vrot.lane.b32.xlu0 %v415, 96
    %v437 = vpop.permute.xlu0 %436
    %438 = vrot.lane.b32.xlu0 %v416, 96
    %v439 = vpop.permute.xlu0 %438
    %440 = vrot.lane.b32.xlu0 %v417, 96
    %v441 = vpop.permute.xlu0 %440
    %v450 = vadd.f32 %v370, %v427
    %v451 = vadd.f32 %v371, %v429
    %v452 = vadd.f32 %v372, %v431
    %v453 = vadd.f32 %v373, %v433
    %v454 = vadd.f32 %v374, %v435
    %v455 = vadd.f32 %v375, %v437
    %v456 = vadd.f32 %v376, %v439
    %v457 = vadd.f32 %v377, %v441
    %v458 = vmax.f32 %v450, 0.0
    %v459 = vmax.f32 %v451, 0.0
    %v460 = vmax.f32 %v452, 0.0
    %v461 = vmax.f32 %v453, 0.0
    %v462 = vmax.f32 %v454, 0.0
    %v463 = vmax.f32 %v455, 0.0
    %v464 = vmax.f32 %v456, 0.0
    %v465 = vmax.f32 %v457, 0.0
    %v466 = vpack.c.bf16 %v459, %v458
    %v467 = vpack.c.bf16 %v461, %v460
    %v468 = vpack.c.bf16 %v463, %v462
    %v469 = vpack.c.bf16 %v465, %v464
    %470 = vmatpush.bf16.msra.mxu0 0
    %471 = vmatpush.bf16.msra.mxu0 0
    %472 = vmatpush.bf16.msra.mxu0 0
    %473 = vmatpush.bf16.msra.mxu0 0
    %474 = vmatpush.bf16.msra.mxu0 %v469
    %475 = vmatpush.bf16.msra.mxu0 %v468
    %476 = vmatpush.bf16.msra.mxu0 %v467
    %477 = vmatpush.bf16.msra.mxu0 %v466
    %478 = vmatmul.bf16.gmra.mxu0 %v224
    %v479 = vpop.f32.mrf.mxu0
    %v480 = vadd.f32 0.0, %v479
    %v481 = vpop.f32.mrf.mxu0
    %v482 = vadd.f32 0.0, %v481
    %483 = vmatmul.bf16.gmra.mxu0 %v227
    %v484 = vpop.f32.mrf.mxu0
    %v485 = vadd.f32 0.0, %v484
    %v486 = vpop.f32.mrf.mxu0
    %v487 = vadd.f32 0.0, %v486
    %488 = vmatmul.bf16.gmra.mxu0 %v230
    %v489 = vpop.f32.mrf.mxu0
    %v490 = vadd.f32 0.0, %v489
    %v491 = vpop.f32.mrf.mxu0
    %v492 = vadd.f32 0.0, %v491
    %493 = vmatmul.bf16.gmra.mxu0 %v233
    %v494 = vpop.f32.mrf.mxu0
    %v495 = vadd.f32 0.0, %v494
    %v496 = vpop.f32.mrf.mxu0
    %v497 = vadd.f32 0.0, %v496
    %498 = vdwg.mxu0
    %v499 = vld [vmem:[%s7] sm:$0xff]
    %v500 = vld [vmem:[%s7 + $0x8] sm:$0xff]
    %v501 = vld [vmem:[%s7 + $0x10] sm:$0xff]
    %v502 = vld [vmem:[%s7 + $0x18] sm:$0xff]
    %v503 = vpack.c.bf16 %v500, %v499
    %v504 = vpack.c.bf16 %v502, %v501
    %v505 = vld [vmem:[#allocation13] sm:$0x1]
    %v507 = vperm.slane %v505, 0
    %vm509 = vcmask 261120
    %v511 = vsel %vm509, %v466, 0
    %v514 = vsel %vm509, %v467, 0
    %v517 = vsel %vm509, %v468, 0
    %v520 = vsel %vm509, %v469, 0
    %522 = vmatpush.bf16.msra.mxu0 0
    %523 = vmatpush.bf16.msra.mxu0 0
    %524 = vmatpush.bf16.msra.mxu0 0
    %525 = vmatpush.bf16.msra.mxu0 0
    %526 = vmatpush.bf16.msra.mxu0 0
    %527 = vmatpush.bf16.msra.mxu0 0
    %528 = vmatpush.bf16.msra.mxu0 %v504
    %529 = vmatpush.bf16.msra.mxu0 %v503
    %530 = vmatmul.bf16.gmra.mxu0 %v511
    %v531 = vpop.f32.mrf.mxu0
    %v532 = vadd.f32 %v507, %v531
    %v533 = vpop.f32.mrf.mxu0
    %v534 = vadd.f32 %v507, %v533
    %535 = vmatmul.bf16.gmra.mxu0 %v514
    %v536 = vpop.f32.mrf.mxu0
    %v537 = vadd.f32 %v507, %v536
    %v538 = vpop.f32.mrf.mxu0
    %v539 = vadd.f32 %v507, %v538
    %540 = vmatmul.bf16.gmra.mxu0 %v517
    %v541 = vpop.f32.mrf.mxu0
    %v542 = vadd.f32 %v507, %v541
    %v543 = vpop.f32.mrf.mxu0
    %v544 = vadd.f32 %v507, %v543
    %545 = vmatmul.bf16.gmra.mxu0 %v520
    %v546 = vpop.f32.mrf.mxu0
    %v547 = vadd.f32 %v507, %v546
    %v548 = vpop.f32.mrf.mxu0
    %v549 = vadd.f32 %v507, %v548
    %550 = vdwg.mxu0
    %v551 = vpack.c.bf16 %v482, %v480
    %v552 = vpack.c.bf16 %v487, %v485
    %v553 = vpack.c.bf16 %v492, %v490
    %v554 = vpack.c.bf16 %v497, %v495
    %v555 = vld [vmem:[%s9] sm:$0xff]
    %v556 = vld [vmem:[%s9 + $0x8] sm:$0xff]
    %v557 = vld [vmem:[%s9 + $0x10] sm:$0xff]
    %v558 = vld [vmem:[%s9 + $0x18] sm:$0xff]
    %v559 = vpack.c.bf16 %v556, %v555
    %v560 = vpack.c.bf16 %v558, %v557
    %v561 = vld [vmem:[#allocation14] sm:$0x1]
    %v563 = vperm.slane %v561, 0
    %v566 = vsel %vm509, %v551, 0
    %v569 = vsel %vm509, %v552, 0
    %v572 = vsel %vm509, %v553, 0
    %v575 = vsel %vm509, %v554, 0
    %577 = vmatpush.bf16.msra.mxu0 0
    %578 = vmatpush.bf16.msra.mxu0 0
    %579 = vmatpush.bf16.msra.mxu0 0
    %580 = vmatpush.bf16.msra.mxu0 0
    %581 = vmatpush.bf16.msra.mxu0 0
    %582 = vmatpush.bf16.msra.mxu0 0
    %583 = vmatpush.bf16.msra.mxu0 %v560
    %584 = vmatpush.bf16.msra.mxu0 %v559
    %585 = vmatmul.bf16.gmra.mxu0 %v566
    %v586 = vpop.f32.mrf.mxu0
    %v587 = vadd.f32 %v563, %v586
    %v588 = vpop.f32.mrf.mxu0
    %v589 = vadd.f32 %v563, %v588
    %590 = vmatmul.bf16.gmra.mxu0 %v569
    %v591 = vpop.f32.mrf.mxu0
    %v592 = vadd.f32 %v563, %v591
    %v593 = vpop.f32.mrf.mxu0
    %v594 = vadd.f32 %v563, %v593
    %595 = vmatmul.bf16.gmra.mxu0 %v572
    %v596 = vpop.f32.mrf.mxu0
    %v597 = vadd.f32 %v563, %v596
    %v598 = vpop.f32.mrf.mxu0
    %v599 = vadd.f32 %v563, %v598
    %600 = vmatmul.bf16.gmra.mxu0 %v575
    %v601 = vpop.f32.mrf.mxu0
    %v602 = vadd.f32 %v563, %v601
    %v603 = vpop.f32.mrf.mxu0
    %v604 = vadd.f32 %v563, %v603
    %605 = vdwg.mxu0
    %v606 = vadd.f32 %v532, %v587
    %v607 = vadd.f32 %v534, %v589
    %v608 = vadd.f32 %v537, %v592
    %v609 = vadd.f32 %v539, %v594
    %v610 = vadd.f32 %v542, %v597
    %v611 = vadd.f32 %v544, %v599
    %v612 = vadd.f32 %v547, %v602
    %v613 = vadd.f32 %v549, %v604
    %622 = vrot.lane.b32.xlu0 %v532, 96
    %v623 = vpop.permute.xlu0 %622
    %624 = vrot.lane.b32.xlu0 %v534, 96
    %v625 = vpop.permute.xlu0 %624
    %626 = vrot.lane.b32.xlu0 %v537, 96
    %v627 = vpop.permute.xlu0 %626
    %628 = vrot.lane.b32.xlu0 %v539, 96
    %v629 = vpop.permute.xlu0 %628
    %630 = vrot.lane.b32.xlu0 %v542, 96
    %v631 = vpop.permute.xlu0 %630
    %632 = vrot.lane.b32.xlu0 %v544, 96
    %v633 = vpop.permute.xlu0 %632
    %634 = vrot.lane.b32.xlu0 %v547, 96
    %v635 = vpop.permute.xlu0 %634
    %636 = vrot.lane.b32.xlu0 %v549, 96
    %v637 = vpop.permute.xlu0 %636
    %v646 = vmul.f32 %v532, %v623
    %v647 = vmul.f32 %v534, %v625
    %v648 = vmul.f32 %v537, %v627
    %v649 = vmul.f32 %v539, %v629
    %v650 = vmul.f32 %v542, %v631
    %v651 = vmul.f32 %v544, %v633
    %v652 = vmul.f32 %v547, %v635
    %v653 = vmul.f32 %v549, %v637
    %662 = vrot.lane.b32.xlu0 %v646, 96
    %v663 = vpop.permute.xlu0 %662
    %664 = vrot.lane.b32.xlu0 %v647, 96
    %v665 = vpop.permute.xlu0 %664
    %666 = vrot.lane.b32.xlu0 %v648, 96
    %v667 = vpop.permute.xlu0 %666
    %668 = vrot.lane.b32.xlu0 %v649, 96
    %v669 = vpop.permute.xlu0 %668
    %670 = vrot.lane.b32.xlu0 %v650, 96
    %v671 = vpop.permute.xlu0 %670
    %672 = vrot.lane.b32.xlu0 %v651, 96
    %v673 = vpop.permute.xlu0 %672
    %674 = vrot.lane.b32.xlu0 %v652, 96
    %v675 = vpop.permute.xlu0 %674
    %676 = vrot.lane.b32.xlu0 %v653, 96
    %v677 = vpop.permute.xlu0 %676
    %v686 = vadd.f32 %v606, %v663
    %v687 = vadd.f32 %v607, %v665
    %v688 = vadd.f32 %v608, %v667
    %v689 = vadd.f32 %v609, %v669
    %v690 = vadd.f32 %v610, %v671
    %v691 = vadd.f32 %v611, %v673
    %v692 = vadd.f32 %v612, %v675
    %v693 = vadd.f32 %v613, %v677
    %v694 = vmax.f32 %v686, 0.0
    %v695 = vmax.f32 %v687, 0.0
    %v696 = vmax.f32 %v688, 0.0
    %v697 = vmax.f32 %v689, 0.0
    %v698 = vmax.f32 %v690, 0.0
    %v699 = vmax.f32 %v691, 0.0
    %v700 = vmax.f32 %v692, 0.0
    %v701 = vmax.f32 %v693, 0.0
    %v702 = vpack.c.bf16 %v695, %v694
    %v703 = vpack.c.bf16 %v697, %v696
    %v704 = vpack.c.bf16 %v699, %v698
    %v705 = vpack.c.bf16 %v701, %v700
    %706 = vmatpush.bf16.msra.mxu0 0
    %707 = vmatpush.bf16.msra.mxu0 0
    %708 = vmatpush.bf16.msra.mxu0 0
    %709 = vmatpush.bf16.msra.mxu0 0
    %710 = vmatpush.bf16.msra.mxu0 %v705
    %711 = vmatpush.bf16.msra.mxu0 %v704
    %712 = vmatpush.bf16.msra.mxu0 %v703
    %713 = vmatpush.bf16.msra.mxu0 %v702
    %714 = vmatmul.bf16.gmra.mxu0 %v224
    %v715 = vpop.f32.mrf.mxu0
    %v716 = vadd.f32 0.0, %v715
    %v717 = vpop.f32.mrf.mxu0
    %v718 = vadd.f32 0.0, %v717
    %719 = vmatmul.bf16.gmra.mxu0 %v227
    %v720 = vpop.f32.mrf.mxu0
    %v721 = vadd.f32 0.0, %v720
    %v722 = vpop.f32.mrf.mxu0
    %v723 = vadd.f32 0.0, %v722
    %724 = vmatmul.bf16.gmra.mxu0 %v230
    %v725 = vpop.f32.mrf.mxu0
    %v726 = vadd.f32 0.0, %v725
    %v727 = vpop.f32.mrf.mxu0
    %v728 = vadd.f32 0.0, %v727
    %729 = vmatmul.bf16.gmra.mxu0 %v233
    %v730 = vpop.f32.mrf.mxu0
    %v731 = vadd.f32 0.0, %v730
    %v732 = vpop.f32.mrf.mxu0
    %v733 = vadd.f32 0.0, %v732
    %734 = vdwg.mxu0
    %v735 = vld [vmem:[%s11] sm:$0xff]
    %v736 = vld [vmem:[%s11 + $0x8] sm:$0xff]
    %v737 = vld [vmem:[%s11 + $0x10] sm:$0xff]
    %v738 = vld [vmem:[%s11 + $0x18] sm:$0xff]
    %v739 = vpack.c.bf16 %v736, %v735
    %v740 = vpack.c.bf16 %v738, %v737
    %v741 = vld [vmem:[#allocation16] sm:$0x1]
    %v743 = vperm.slane %v741, 0
    %v746 = vsel %vm509, %v702, 0
    %v749 = vsel %vm509, %v703, 0
    %v752 = vsel %vm509, %v704, 0
    %v755 = vsel %vm509, %v705, 0
    %757 = vmatpush.bf16.msra.mxu0 0
    %758 = vmatpush.bf16.msra.mxu0 0
    %759 = vmatpush.bf16.msra.mxu0 0
    %760 = vmatpush.bf16.msra.mxu0 0
    %761 = vmatpush.bf16.msra.mxu0 0
    %762 = vmatpush.bf16.msra.mxu0 0
    %763 = vmatpush.bf16.msra.mxu0 %v740
    %764 = vmatpush.bf16.msra.mxu0 %v739
    %765 = vmatmul.bf16.gmra.mxu0 %v746
    %v766 = vpop.f32.mrf.mxu0
    %v767 = vadd.f32 %v743, %v766
    %v768 = vpop.f32.mrf.mxu0
    %v769 = vadd.f32 %v743, %v768
    %770 = vmatmul.bf16.gmra.mxu0 %v749
    %v771 = vpop.f32.mrf.mxu0
    %v772 = vadd.f32 %v743, %v771
    %v773 = vpop.f32.mrf.mxu0
    %v774 = vadd.f32 %v743, %v773
    %775 = vmatmul.bf16.gmra.mxu0 %v752
    %v776 = vpop.f32.mrf.mxu0
    %v777 = vadd.f32 %v743, %v776
    %v778 = vpop.f32.mrf.mxu0
    %v779 = vadd.f32 %v743, %v778
    %780 = vmatmul.bf16.gmra.mxu0 %v755
    %v781 = vpop.f32.mrf.mxu0
    %v782 = vadd.f32 %v743, %v781
    %v783 = vpop.f32.mrf.mxu0
    %v784 = vadd.f32 %v743, %v783
    %785 = vdwg.mxu0
    %v786 = vpack.c.bf16 %v718, %v716
    %v787 = vpack.c.bf16 %v723, %v721
    %v788 = vpack.c.bf16 %v728, %v726
    %v789 = vpack.c.bf16 %v733, %v731
    %v790 = vld [vmem:[%s13] sm:$0xff]
    %v791 = vld [vmem:[%s13 + $0x8] sm:$0xff]
    %v792 = vld [vmem:[%s13 + $0x10] sm:$0xff]
    %v793 = vld [vmem:[%s13 + $0x18] sm:$0xff]
    %v794 = vpack.c.bf16 %v791, %v790
    %v795 = vpack.c.bf16 %v793, %v792
    %v796 = vld [vmem:[%s14] sm:$0x1]
    %v798 = vperm.slane %v796, 0
    %v801 = vsel %vm509, %v786, 0
    %v804 = vsel %vm509, %v787, 0
    %v807 = vsel %vm509, %v788, 0
    %v810 = vsel %vm509, %v789, 0
    %812 = vmatpush.bf16.msra.mxu0 0
    %813 = vmatpush.bf16.msra.mxu0 0
    %814 = vmatpush.bf16.msra.mxu0 0
    %815 = vmatpush.bf16.msra.mxu0 0
    %816 = vmatpush.bf16.msra.mxu0 0
    %817 = vmatpush.bf16.msra.mxu0 0
    %818 = vmatpush.bf16.msra.mxu0 %v795
    %819 = vmatpush.bf16.msra.mxu0 %v794
    %820 = vmatmul.bf16.gmra.mxu0 %v801
    %v821 = vpop.f32.mrf.mxu0
    %v822 = vadd.f32 %v798, %v821
    %v823 = vpop.f32.mrf.mxu0
    %v824 = vadd.f32 %v798, %v823
    %825 = vmatmul.bf16.gmra.mxu0 %v804
    %v826 = vpop.f32.mrf.mxu0
    %v827 = vadd.f32 %v798, %v826
    %v828 = vpop.f32.mrf.mxu0
    %v829 = vadd.f32 %v798, %v828
    %830 = vmatmul.bf16.gmra.mxu0 %v807
    %v831 = vpop.f32.mrf.mxu0
    %v832 = vadd.f32 %v798, %v831
    %v833 = vpop.f32.mrf.mxu0
    %v834 = vadd.f32 %v798, %v833
    %835 = vmatmul.bf16.gmra.mxu0 %v810
    %v836 = vpop.f32.mrf.mxu0
    %v837 = vadd.f32 %v798, %v836
    %v838 = vpop.f32.mrf.mxu0
    %v839 = vadd.f32 %v798, %v838
    %840 = vdwg.mxu0
    %v841 = vadd.f32 %v767, %v822
    %v842 = vadd.f32 %v769, %v824
    %v843 = vadd.f32 %v772, %v827
    %v844 = vadd.f32 %v774, %v829
    %v845 = vadd.f32 %v777, %v832
    %v846 = vadd.f32 %v779, %v834
    %v847 = vadd.f32 %v782, %v837
    %v848 = vadd.f32 %v784, %v839
    %857 = vrot.lane.b32.xlu0 %v767, 96
    %v858 = vpop.permute.xlu0 %857
    %859 = vrot.lane.b32.xlu0 %v769, 96
    %v860 = vpop.permute.xlu0 %859
    %861 = vrot.lane.b32.xlu0 %v772, 96
    %v862 = vpop.permute.xlu0 %861
    %863 = vrot.lane.b32.xlu0 %v774, 96
    %v864 = vpop.permute.xlu0 %863
    %865 = vrot.lane.b32.xlu0 %v777, 96
    %v866 = vpop.permute.xlu0 %865
    %867 = vrot.lane.b32.xlu0 %v779, 96
    %v868 = vpop.permute.xlu0 %867
    %869 = vrot.lane.b32.xlu0 %v782, 96
    %v870 = vpop.permute.xlu0 %869
    %871 = vrot.lane.b32.xlu0 %v784, 96
    %v872 = vpop.permute.xlu0 %871
    %v881 = vmul.f32 %v767, %v858
    %v882 = vmul.f32 %v769, %v860
    %v883 = vmul.f32 %v772, %v862
    %v884 = vmul.f32 %v774, %v864
    %v885 = vmul.f32 %v777, %v866
    %v886 = vmul.f32 %v779, %v868
    %v887 = vmul.f32 %v782, %v870
    %v888 = vmul.f32 %v784, %v872
    %897 = vrot.lane.b32.xlu0 %v881, 96
    %v898 = vpop.permute.xlu0 %897
    %899 = vrot.lane.b32.xlu0 %v882, 96
    %v900 = vpop.permute.xlu0 %899
    %901 = vrot.lane.b32.xlu0 %v883, 96
    %v902 = vpop.permute.xlu0 %901
    %903 = vrot.lane.b32.xlu0 %v884, 96
    %v904 = vpop.permute.xlu0 %903
    %905 = vrot.lane.b32.xlu0 %v885, 96
    %v906 = vpop.permute.xlu0 %905
    %907 = vrot.lane.b32.xlu0 %v886, 96
    %v908 = vpop.permute.xlu0 %907
    %909 = vrot.lane.b32.xlu0 %v887, 96
    %v910 = vpop.permute.xlu0 %909
    %911 = vrot.lane.b32.xlu0 %v888, 96
    %v912 = vpop.permute.xlu0 %911
    %v921 = vadd.f32 %v841, %v898
    %v922 = vadd.f32 %v842, %v900
    %v923 = vadd.f32 %v843, %v902
    %v924 = vadd.f32 %v844, %v904
    %v925 = vadd.f32 %v845, %v906
    %v926 = vadd.f32 %v846, %v908
    %v927 = vadd.f32 %v847, %v910
    %v928 = vadd.f32 %v848, %v912
    %v929 = vmax.f32 %v921, 0.0
    %v930 = vmax.f32 %v922, 0.0
    %v931 = vmax.f32 %v923, 0.0
    %v932 = vmax.f32 %v924, 0.0
    %v933 = vmax.f32 %v925, 0.0
    %v934 = vmax.f32 %v926, 0.0
    %v935 = vmax.f32 %v927, 0.0
    %v936 = vmax.f32 %v928, 0.0
    %v937 = vld [vmem:[#allocation5] sm:$0xf]
    %v939 = vsel %vm222, %v937, 0
    %941 = vmatpush.msra.mxu0 0.0
    %942 = vmatpush.msra.mxu0 0.0
    %943 = vmatpush.msra.mxu0 0.0
    %944 = vmatpush.msra.mxu0 0.0
    %945 = vmatpush.msra.mxu0 0.0
    %946 = vmatpush.msra.mxu0 0.0
    %947 = vmatpush.msra.mxu0 0.0
    %948 = vmatpush.msra.mxu0 0.0
    %949 = vmatpush.msra.mxu0 %v936
    %950 = vmatpush.msra.mxu0 %v935
    %951 = vmatpush.msra.mxu0 %v934
    %952 = vmatpush.msra.mxu0 %v933
    %953 = vmatpush.msra.mxu0 %v932
    %954 = vmatpush.msra.mxu0 %v931
    %955 = vmatpush.msra.mxu0 %v930
    %956 = vmatpush.msra.mxu0 %v929
    %957 = vmatmul.f32.gmra.mxu0 %v939
    %v958 = vpop.f32.mrf.mxu0
    %v959 = vadd.f32 0.0, %v958
    %960 = vdwg.mxu0
    %v961 = vld [vmem:[%s15] sm:$0xff]
    %v962 = vld [vmem:[%s15 + $0x8] sm:$0xff]
    %v963 = vld [vmem:[%s15 + $0x10] sm:$0xff]
    %v964 = vld [vmem:[%s15 + $0x18] sm:$0xff]
    %v965 = vld [vmem:[%s16] sm:$0x1]
    %v967 = vperm.slane %v965, 0
    %v970 = vsel %vm509, %v959, 0
    %972 = vmatpush.msra.mxu0 0.0
    %973 = vmatpush.msra.mxu0 0.0
    %974 = vmatpush.msra.mxu0 0.0
    %975 = vmatpush.msra.mxu0 0.0
    %976 = vmatpush.msra.mxu0 0.0
    %977 = vmatpush.msra.mxu0 0.0
    %978 = vmatpush.msra.mxu0 0.0
    %979 = vmatpush.msra.mxu0 0.0
    %980 = vmatpush.msra.mxu0 0.0
    %981 = vmatpush.msra.mxu0 0.0
    %982 = vmatpush.msra.mxu0 0.0
    %983 = vmatpush.msra.mxu0 0.0
    %984 = vmatpush.msra.mxu0 %v964
    %985 = vmatpush.msra.mxu0 %v963
    %986 = vmatpush.msra.mxu0 %v962
    %987 = vmatpush.msra.mxu0 %v961
    %988 = vmatmul.f32.gmra.mxu0 %v970
    %v989 = vpop.f32.mrf.mxu0
    %v990 = vadd.f32 %v967, %v989
    %991 = vdwg.mxu0
    %v992 = vld [vmem:[%s17] sm:$0xff]
    %v993 = vld [vmem:[%s17 + $0x8] sm:$0x3]
    %v994 = vld [vmem:[%s18] sm:$0x1]
    %v996 = vperm.slane %v994, 0
    %vm998 = vcmask 80896
    %v1000 = vsel %vm998, %v990, 0
    %v1003 = vsel %vm283, %v993, 0
    %1005 = vmatpush.msra.mxu0 0.0
    %1006 = vmatpush.msra.mxu0 0.0
    %1007 = vmatpush.msra.mxu0 0.0
    %1008 = vmatpush.msra.mxu0 0.0
    %1009 = vmatpush.msra.mxu0 0.0
    %1010 = vmatpush.msra.mxu0 0.0
    %1011 = vmatpush.msra.mxu0 0.0
    %1012 = vmatpush.msra.mxu0 0.0
    %1013 = vmatpush.msra.mxu0 0.0
    %1014 = vmatpush.msra.mxu0 0.0
    %1015 = vmatpush.msra.mxu0 0.0
    %1016 = vmatpush.msra.mxu0 0.0
    %1017 = vmatpush.msra.mxu0 0.0
    %1018 = vmatpush.msra.mxu0 0.0
    %1019 = vmatpush.msra.mxu0 %v1003
    %1020 = vmatpush.msra.mxu0 %v992
    %1021 = vmatmul.f32.gmra.mxu0 %v1000
    %v1022 = vpop.f32.mrf.mxu0
    %v1023 = vadd.f32 %v996, %v1022
    %1024 = vdwg.mxu0
    %vm1025 = vcmask 19456
    %1026 = vst.msk [vmem:[#allocation17] sm:$0xf] %vm1025, %v1023
    // Predicated region
    $region114: #{tpu_custom_call.1} parent=1 // pred_check
      _
    $region115: #{tpu_custom_call.1} parent=1 // pred_check_branch
      %1028 = sbr.rel (0) target = $region117
    $region116: #{tpu_custom_call.1} parent=1 // pred_region
      %1030 = vsyncadd [#allocation4], 0
      %s1032 = sshll.u32 [#allocation17], 4
      %s1033 = int_to_ptr.vmem [resolvable:$true] %s1032
      %s1034 = sshll.u32 %s19, 4
      %s1035 = int_to_ptr.hbm [resolvable:$true] %s1034
      %1037 = dma.vmem_to_hbm [thread:$0]  %s1033, 64, %s1035, [#allocation4]
    $region117: #{tpu_custom_call.1} parent=1 // pred_fallthru
      _
    // Predicated region
    $region118: #{tpu_custom_call.1} parent=1 // pred_check
      _
    $region119: #{tpu_custom_call.1} parent=1 // pred_check_branch
      %1039 = sbr.rel (0) target = $region121
    $region120: #{tpu_custom_call.1} parent=1 // pred_region
      %1041 = dma.done [#allocation4], 64
    $region121: #{tpu_custom_call.1} parent=1 // pred_fallthru
      _
    %1042 = vsyncpa [#allocation3], 1
    %1043 = vsyncpa [#allocation6], 1
    %1044 = vsyncpa [#allocation9], 1
    %1045 = vsyncpa [#allocation12], 1
    %1046 = vsyncpa [#allocation15], 1
    %1047 = vsyncpa [#allocation4], 1

</llo_original>
